<compile_context>
chip_gen: v7x
topology: tpu7x:2x2x1
jax: 0.10.0
libtpu: 0.0.40
codegen_flags: <defaults>
</compile_context>

<pallas_src>
import functools

import jax
import jax.numpy as jnp
from jax.experimental import pallas as pl
from jax.experimental.pallas import tpu as pltpu


def _focal_chunk(x, t, *, gamma, alpha, binary_targets):
    """Per-element focal loss for one (chunk_rows, 128) slab."""
    x = x.astype(jnp.float32)
    if binary_targets:
        # Exact for t in {0,1}: bce == softplus(-s) with s = x if t==1 else -x.
        m = t > 0                              # single compare, no f32 cast of t
        s = jnp.where(m, x, -x)
        e = jnp.exp(-jnp.abs(x))               # reused for both bce and pt
        bce = jnp.maximum(-s, 0.0) + jnp.log1p(e)
        # pt = exp(-bce) = sigmoid(s), recovered from e (no second exp);
        # approx reciprocal rides the EUP slot nearly free.
        pt = jnp.where(s >= 0, 1.0, e) * pl.reciprocal(1.0 + e, approx=True)
    else:
        # General targets: exact reference formulation.
        tf = t.astype(jnp.float32)
        e = jnp.exp(-jnp.abs(x))
        bce = jnp.maximum(x, 0.0) - x * tf + jnp.log1p(e)
        pt = jnp.exp(-bce)

    # Clamp: approx pt can slightly exceed 1; also guards log(negative) for
    # non-integer gamma.
    one_minus_pt = jnp.maximum(1.0 - pt, 0.0)

    g = float(gamma)
    if g == 1.0:
        modulator = one_minus_pt
    elif g.is_integer():
        modulator = one_minus_pt ** int(g)      # integer_pow -> plain multiplies
    else:
        modulator = one_minus_pt ** g

    focal = modulator * bce

    if alpha is not None:
        a0, a1 = alpha
        if binary_targets:
            focal = jnp.where(m, jnp.float32(a1), jnp.float32(a0)) * focal
        else:
            focal = (a0 * (1.0 - t.astype(jnp.float32))
                     + a1 * t.astype(jnp.float32)) * focal
    return focal


def _focal_loss_kernel(x_ref, t_ref, out_ref, *, n_rows, rows_per_tile,
                       chunk_rows, acc_rows, tiles_per_split, gamma, alpha,
                       binary_targets):
    c = pl.program_id(0)          # parallel split (megacore)
    i = pl.program_id(1)          # reduction axis
    lanes = out_ref.shape[-1]

    @pl.when(i == 0)
    def _():
        out_ref[...] = jnp.zeros_like(out_ref)

    tile_start = (c * tiles_per_split + i) * rows_per_tile
    n_chunks = rows_per_tile // chunk_rows

    def make_body(masked):
        def body(j, carry):
            r0 = pl.multiple_of(j * chunk_rows, chunk_rows)
            x = x_ref[pl.ds(r0, chunk_rows), :]
            t = t_ref[pl.ds(r0, chunk_rows), :]
            f = _focal_chunk(x, t, gamma=gamma, alpha=alpha,
                             binary_targets=binary_targets)
            if masked:
                # Rows >= n_rows are implicit block padding (garbage); zero them.
                row = (tile_start + r0
                       + jax.lax.broadcasted_iota(jnp.int32,
                                                  (chunk_rows, lanes), 0))
                f = jnp.where(row < n_rows, f, 0.0)
            # Partial-reduce to a wide (acc_rows, 128) accumulator: several
            # independent vreg add chains, pure VPU (no per-step XLU reduce).
            out_ref[...] += jnp.sum(
                f.reshape(chunk_rows // acc_rows, acc_rows, lanes), axis=0)
            return carry
        return body

    def run(masked):
        body = make_body(masked)
        if n_chunks == 1:
            body(0, 0)
        else:
            jax.lax.fori_loop(0, n_chunks, body, 0)

    full_tile = tile_start + rows_per_tile <= n_rows

    @pl.when(full_tile)              # steady state: no mask cost
    def _():
        run(masked=False)

    @pl.when(jnp.logical_not(full_tile))   # ragged / phantom last tile only
    def _():
        run(masked=True)


def focal_loss(inputs, targets, *, alpha=None, gamma=2.0, reduction="mean",
               binary_targets=True, rows_per_tile=8192, max_splits=2):
    """Pallas implementation of FocalLoss.forward.

    binary_targets=True (default) assumes targets in {0,1} and uses the
    cheaper sign-select / single-select-alpha formulation (exact for binary
    targets).  Set binary_targets=False for soft / label-smoothed targets to
    get the exact reference formulas.
    """
    assert inputs.shape == targets.shape
    lanes = 128
    n_elem = inputs.size
    assert n_elem > 0
    if reduction == "mean":
        scale = 1.0 / float(n_elem)
    elif reduction == "sum":
        scale = 1.0
    else:
        raise ValueError("reduction must be 'mean' or 'sum'")

    # Free reshapes only — no dtype casts, no padding in the common case.
    x_flat = inputs.reshape(-1)
    t_flat = targets.reshape(-1)

    rem = n_elem % lanes
    if rem:
        # TODO(synk): zero-copy ragged-lane path (1-D blocks / manual DMA); for
        # now pad only the <128-element lane tail.  Pad logit -88 with target 0
        # contributes (numerically) zero loss, so no extra masking is needed.
        pad = lanes - rem
        x_flat = jnp.pad(x_flat, (0, pad), constant_values=-88.0)
        t_flat = jnp.pad(t_flat, (0, pad))

    n_rows = x_flat.size // lanes
    x2d = x_flat.reshape(n_rows, lanes)
    t2d = t_flat.reshape(n_rows, lanes)

    # ---- Tiling: big row blocks, bounded by an explicit VMEM budget. ----
    x_bytes = x2d.dtype.itemsize
    t_bytes = t2d.dtype.itemsize
    bytes_per_row = lanes * (x_bytes + t_bytes)
    # Keep double-buffered input blocks within ~32 MiB (explicit limit below,
    # so v5e's 16 MiB *default* scoped VMEM is not a constraint).
    max_rows_by_vmem = max(32, (32 << 20) // (2 * bytes_per_row))

    rpt = min(int(rows_per_tile), int(max_rows_by_vmem))
    rpt = max(32, (rpt // 32) * 32)                      # 32-sublane granularity
    rpt = min(rpt, ((n_rows + 31) // 32) * 32)           # don't exceed the data
    chunk_rows = min(256, rpt)                           # bounded live values
    rpt = max(chunk_rows, (rpt // chunk_rows) * chunk_rows)
    acc_rows = 64 if chunk_rows % 64 == 0 else 32        # 4-8 accumulator vregs

    n_tiles = pl.cdiv(n_rows, rpt)
    # Megacore split only when each core gets a few full tiles.
    splits = max_splits if (max_splits > 1 and n_tiles >= 4 * max_splits) else 1
    tiles_per_split = pl.cdiv(n_tiles, splits)

    vmem_limit = int(2 * rpt * bytes_per_row + (8 << 20))

    kernel = functools.partial(
        _focal_loss_kernel,
        n_rows=n_rows, rows_per_tile=rpt, chunk_rows=chunk_rows,
        acc_rows=acc_rows, tiles_per_split=tiles_per_split,
        gamma=float(gamma),
        alpha=None if alpha is None else (float(alpha[0]), float(alpha[1])),
        binary_targets=bool(binary_targets))

    def in_map(c, i):
        # Clamp phantom tiles (from the splits cdiv rounding) to the last real
        # block; their contribution is fully masked in-kernel.
        return (jnp.minimum(c * tiles_per_split + i, n_tiles - 1), 0)

    partials = pl.pallas_call(
        kernel,
        out_shape=jax.ShapeDtypeStruct((splits * acc_rows, lanes), jnp.float32),
        grid_spec=pltpu.PrefetchScalarGridSpec(
            num_scalar_prefetch=0,
            grid=(splits, tiles_per_split),
            in_specs=[pl.BlockSpec((rpt, lanes), in_map),
                      pl.BlockSpec((rpt, lanes), in_map)],
            out_specs=pl.BlockSpec((acc_rows, lanes), lambda c, i: (c, 0)),
        ),
        compiler_params=pltpu.CompilerParams(
            dimension_semantics=("parallel", "arbitrary"),
            vmem_limit_bytes=vmem_limit),
    )(x2d, t2d)

    # Tiny final cross-lane reduction + scaling outside the kernel.
    return jnp.sum(partials) * scale


def focal_loss_ref(inputs, targets, *, alpha=None, gamma=2.0, reduction="mean"):
    """Pure-JAX reference matching the PyTorch module semantics."""
    x = inputs.astype(jnp.float32)
    t = targets.astype(jnp.float32)
    bce = jnp.maximum(x, 0.0) - x * t + jnp.log1p(jnp.exp(-jnp.abs(x)))
    pt = jnp.exp(-bce)
    fl = (1.0 - pt) ** gamma * bce
    if alpha is not None:
        alpha_t = alpha[0] * (1.0 - t) + alpha[1] * t
        fl = alpha_t * fl
    return jnp.mean(fl) if reduction == "mean" else jnp.sum(fl)


if __name__ == "__main__":
    key = jax.random.PRNGKey(0)
    k1, k2, k3, k4, k5, k6 = jax.random.split(key, 6)

    alpha = (0.25, 0.75)
    gamma = 2.0

    # 1) Small NCHW logits, binary f32 targets, alpha + mean (zero-copy path).
    x = jax.random.normal(k1, (2, 4, 16, 16), dtype=jnp.float32)
    t = (jax.random.uniform(k2, (2, 4, 16, 16)) > 0.5).astype(jnp.float32)
    out = jax.block_until_ready(
        focal_loss(x, t, alpha=alpha, gamma=gamma, reduction="mean"))
    ref = focal_loss_ref(x, t, alpha=alpha, gamma=gamma, reduction="mean")
    assert jnp.allclose(out, ref, rtol=2e-3, atol=1e-6), (out, ref)

    # 2) 'sum' reduction, no alpha.
    out2 = jax.block_until_ready(focal_loss(x, t, gamma=gamma, reduction="sum"))
    ref2 = focal_loss_ref(x, t, gamma=gamma, reduction="sum")
    assert jnp.allclose(out2, ref2, rtol=2e-3, atol=1e-3), (out2, ref2)

    # 3) Odd-sized input: lane-pad fallback + in-kernel ragged-row masking.
    x3 = jax.random.normal(k3, (3, 5, 7, 11), dtype=jnp.float32)
    t3 = (jax.random.uniform(k4, (3, 5, 7, 11)) > 0.5).astype(jnp.float32)
    out3 = jax.block_until_ready(
        focal_loss(x3, t3, alpha=alpha, gamma=gamma, reduction="mean"))
    ref3 = focal_loss_ref(x3, t3, alpha=alpha, gamma=gamma, reduction="mean")
    assert jnp.allclose(out3, ref3, rtol=2e-3, atol=1e-6), (out3, ref3)

    # 4) Targets delivered in bf16 (consumed natively, no wrapper cast).
    t_bf = (jax.random.uniform(k5, (2, 4, 16, 16)) > 0.5).astype(jnp.bfloat16)
    out4 = jax.block_until_ready(
        focal_loss(x, t_bf, alpha=alpha, gamma=gamma, reduction="mean"))
    ref4 = focal_loss_ref(x, t_bf, alpha=alpha, gamma=gamma, reduction="mean")
    assert jnp.allclose(out4, ref4, rtol=2e-3, atol=1e-6), (out4, ref4)

    # 5) Soft targets + non-integer gamma via the exact general path.
    t_soft = jax.random.uniform(k6, (2, 4, 16, 16), dtype=jnp.float32)
    out5 = jax.block_until_ready(
        focal_loss(x, t_soft, alpha=alpha, gamma=1.5, reduction="mean",
                   binary_targets=False))
    ref5 = focal_loss_ref(x, t_soft, alpha=alpha, gamma=1.5, reduction="mean")
    assert jnp.allclose(out5, ref5, rtol=1e-5, atol=1e-6), (out5, ref5)

    # 6) Multi-tile grid + megacore split + cross-step accumulation
    #    (force small tiles so the (2, 4) grid path is exercised).
    kx, kt = jax.random.split(k5)
    x6 = jax.random.normal(kx, (8, 4, 64, 64), dtype=jnp.float32)
    t6 = (jax.random.uniform(kt, (8, 4, 64, 64)) > 0.5).astype(jnp.float32)
    out6 = jax.block_until_ready(
        focal_loss(x6, t6, alpha=alpha, gamma=gamma, reduction="mean",
                   rows_per_tile=128))
    ref6 = focal_loss_ref(x6, t6, alpha=alpha, gamma=gamma, reduction="mean")
    assert jnp.allclose(out6, ref6, rtol=2e-3, atol=1e-6), (out6, ref6)

    print("KERNEL_OK")
</pallas_src>

<mosaic_0001>
module attributes {stable_mosaic.version = 11 : i64} {
  func.func @_focal_loss_kernel(%arg0: i32, %arg1: i32, %arg2: memref<32x128xf32, #tpu.memory_space<vmem>>, %arg3: memref<32x128xf32, #tpu.memory_space<vmem>>, %arg4: memref<32x128xf32, #tpu.memory_space<vmem>>) attributes {dimension_semantics = [#tpu.dimension_semantics<parallel>, #tpu.dimension_semantics<arbitrary>], iteration_bounds = array<i64: 1, 1>, scalar_prefetch = 0 : i64, scratch_operands = 0 : i64, tpu.core_type = #tpu.core_type<tc>, window_params = [{transform_indices = @transform_0, window_bounds = array<i64: 32, 128>}, {transform_indices = @transform_1, window_bounds = array<i64: 32, 128>}, {transform_indices = @transform_2, window_bounds = array<i64: 32, 128>}]} {
    %c0_i32 = arith.constant 0 : i32
    %0 = arith.cmpi eq, %arg1, %c0_i32 : i32
    %1 = arith.extui %0 : i1 to i32
    %c0_i32_0 = arith.constant 0 : i32
    %2 = arith.cmpi ne, %1, %c0_i32_0 : i32
    scf.if %2 {
      %cst = arith.constant 0.000000e+00 : f32
      %13 = vector.broadcast %cst : f32 to vector<32x128xf32>
      %c0 = arith.constant 0 : index
      %c0_4 = arith.constant 0 : index
      %14 = vector.load %arg4[%c0, %c0_4] : memref<32x128xf32, #tpu.memory_space<vmem>>, vector<32x128xf32>
      tpu.vector_store %arg4[%c0, %c0_4], %13 {strides = array<i32>} : memref<32x128xf32, #tpu.memory_space<vmem>>, vector<32x128xf32>,
    } else {
    }
    %c1_i32 = arith.constant 1 : i32
    %3 = arith.muli %arg0, %c1_i32 : i32
    %4 = arith.addi %3, %arg1 : i32
    %c32_i32 = arith.constant 32 : i32
    %5 = arith.muli %4, %c32_i32 : i32
    %c32_i32_1 = arith.constant 32 : i32
    %6 = arith.addi %5, %c32_i32_1 : i32
    %c16_i32 = arith.constant 16 : i32
    %7 = arith.cmpi sle, %6, %c16_i32 : i32
    %8 = arith.extui %7 : i1 to i32
    %c0_i32_2 = arith.constant 0 : i32
    %9 = arith.cmpi ne, %8, %c0_i32_2 : i32
    scf.if %9 {
      %c0_i32_4 = arith.constant 0 : i32
      %13 = tpu.assume_multiple %c0_i32_4, 32 : i32
      %14 = arith.index_cast %13 : i32 to index
      %c0 = arith.constant 0 : index
      %15 = vector.load %arg2[%14, %c0] : memref<32x128xf32, #tpu.memory_space<vmem>>, vector<32x128xf32>
      %16 = arith.index_cast %13 : i32 to index
      %c0_5 = arith.constant 0 : index
      %17 = vector.load %arg3[%16, %c0_5] : memref<32x128xf32, #tpu.memory_space<vmem>>, vector<32x128xf32>
      %cst = arith.constant 0.000000e+00 : f32
      %18 = vector.broadcast %cst : f32 to vector<32x128xf32>
      %19 = arith.cmpf ogt, %17, %18 : vector<32x128xf32>
      %cst_6 = arith.constant 0.000000e+00 : f32
      %20 = vector.broadcast %cst_6 : f32 to vector<32x128xf32>
      %21 = arith.subf %20, %15 : vector<32x128xf32>
      %22 = arith.select %19, %15, %21 : vector<32x128xi1>, vector<32x128xf32>
      %23 = math.absf %15 : vector<32x128xf32>
      %cst_7 = arith.constant 0.000000e+00 : f32
      %24 = vector.broadcast %cst_7 : f32 to vector<32x128xf32>
      %25 = arith.subf %24, %23 : vector<32x128xf32>
      %26 = math.exp %25 : vector<32x128xf32>
      %cst_8 = arith.constant 0.000000e+00 : f32
      %27 = vector.broadcast %cst_8 : f32 to vector<32x128xf32>
      %28 = arith.subf %27, %22 : vector<32x128xf32>
      %cst_9 = arith.constant 0.000000e+00 : f32
      %29 = vector.broadcast %cst_9 : f32 to vector<32x128xf32>
      %30 = arith.maximumf %28, %29 : vector<32x128xf32>
      %31 = math.log1p %26 : vector<32x128xf32>
      %32 = arith.addf %30, %31 : vector<32x128xf32>
      %cst_10 = arith.constant 0.000000e+00 : f32
      %33 = vector.broadcast %cst_10 : f32 to vector<32x128xf32>
      %34 = arith.cmpf oge, %22, %33 : vector<32x128xf32>
      %cst_11 = arith.constant 1.000000e+00 : f32
      %35 = vector.broadcast %cst_11 : f32 to vector<32x128xf32>
      %36 = arith.select %34, %35, %26 : vector<32x128xi1>, vector<32x128xf32>
      %cst_12 = arith.constant 1.000000e+00 : f32
      %37 = vector.broadcast %cst_12 : f32 to vector<32x128xf32>
      %38 = arith.addf %37, %26 : vector<32x128xf32>
      %39 = tpu.reciprocal %38 {approx = true} : vector<32x128xf32> -> vector<32x128xf32>
      %40 = arith.mulf %36, %39 : vector<32x128xf32>
      %cst_13 = arith.constant 1.000000e+00 : f32
      %41 = vector.broadcast %cst_13 : f32 to vector<32x128xf32>
      %42 = arith.subf %41, %40 : vector<32x128xf32>
      %cst_14 = arith.constant 0.000000e+00 : f32
      %43 = vector.broadcast %cst_14 : f32 to vector<32x128xf32>
      %44 = arith.maximumf %42, %43 : vector<32x128xf32>
      %45 = arith.mulf %44, %44 : vector<32x128xf32>
      %46 = arith.mulf %45, %32 : vector<32x128xf32>
      %cst_15 = arith.constant 7.500000e-01 : f32
      %cst_16 = arith.constant 2.500000e-01 : f32
      %47 = vector.broadcast %cst_15 : f32 to vector<32x128xf32>
      %48 = vector.broadcast %cst_16 : f32 to vector<32x128xf32>
      %49 = arith.select %19, %47, %48 : vector<32x128xi1>, vector<32x128xf32>
      %50 = arith.mulf %49, %46 : vector<32x128xf32>
      %c0_17 = arith.constant 0 : index
      %c0_18 = arith.constant 0 : index
      %51 = vector.load %arg4[%c0_17, %c0_18] : memref<32x128xf32, #tpu.memory_space<vmem>>, vector<32x128xf32>
      %52 = vector.shape_cast %50 : vector<32x128xf32> to vector<1x32x128xf32>
      %cst_19 = arith.constant dense<0.000000e+00> : vector<32x128xf32>
      %53 = vector.multi_reduction <add>, %52, %cst_19 [0] : vector<1x32x128xf32> to vector<32x128xf32>
      %54 = arith.addf %51, %53 : vector<32x128xf32>
      %c0_20 = arith.constant 0 : index
      %c0_21 = arith.constant 0 : index
      %55 = vector.load %arg4[%c0_20, %c0_21] : memref<32x128xf32, #tpu.memory_space<vmem>>, vector<32x128xf32>
      tpu.vector_store %arg4[%c0_20, %c0_21], %54 {strides = array<i32>} : memref<32x128xf32, #tpu.memory_space<vmem>>, vector<32x128xf32>,
    } else {
    }
    %true = arith.constant true
    %10 = arith.xori %7, %true : i1
    %11 = arith.extui %10 : i1 to i32
    %c0_i32_3 = arith.constant 0 : i32
    %12 = arith.cmpi ne, %11, %c0_i32_3 : i32
    scf.if %12 {
      %c0_i32_4 = arith.constant 0 : i32
      %13 = tpu.assume_multiple %c0_i32_4, 32 : i32
      %14 = arith.index_cast %13 : i32 to index
      %c0 = arith.constant 0 : index
      %15 = vector.load %arg2[%14, %c0] : memref<32x128xf32, #tpu.memory_space<vmem>>, vector<32x128xf32>
      %16 = arith.index_cast %13 : i32 to index
      %c0_5 = arith.constant 0 : index
      %17 = vector.load %arg3[%16, %c0_5] : memref<32x128xf32, #tpu.memory_space<vmem>>, vector<32x128xf32>
      %cst = arith.constant 0.000000e+00 : f32
      %18 = vector.broadcast %cst : f32 to vector<32x128xf32>
      %19 = arith.cmpf ogt, %17, %18 : vector<32x128xf32>
      %cst_6 = arith.constant 0.000000e+00 : f32
      %20 = vector.broadcast %cst_6 : f32 to vector<32x128xf32>
      %21 = arith.subf %20, %15 : vector<32x128xf32>
      %22 = arith.select %19, %15, %21 : vector<32x128xi1>, vector<32x128xf32>
      %23 = math.absf %15 : vector<32x128xf32>
      %cst_7 = arith.constant 0.000000e+00 : f32
      %24 = vector.broadcast %cst_7 : f32 to vector<32x128xf32>
      %25 = arith.subf %24, %23 : vector<32x128xf32>
      %26 = math.exp %25 : vector<32x128xf32>
      %cst_8 = arith.constant 0.000000e+00 : f32
      %27 = vector.broadcast %cst_8 : f32 to vector<32x128xf32>
      %28 = arith.subf %27, %22 : vector<32x128xf32>
      %cst_9 = arith.constant 0.000000e+00 : f32
      %29 = vector.broadcast %cst_9 : f32 to vector<32x128xf32>
      %30 = arith.maximumf %28, %29 : vector<32x128xf32>
      %31 = math.log1p %26 : vector<32x128xf32>
      %32 = arith.addf %30, %31 : vector<32x128xf32>
      %cst_10 = arith.constant 0.000000e+00 : f32
      %33 = vector.broadcast %cst_10 : f32 to vector<32x128xf32>
      %34 = arith.cmpf oge, %22, %33 : vector<32x128xf32>
      %cst_11 = arith.constant 1.000000e+00 : f32
      %35 = vector.broadcast %cst_11 : f32 to vector<32x128xf32>
      %36 = arith.select %34, %35, %26 : vector<32x128xi1>, vector<32x128xf32>
      %cst_12 = arith.constant 1.000000e+00 : f32
      %37 = vector.broadcast %cst_12 : f32 to vector<32x128xf32>
      %38 = arith.addf %37, %26 : vector<32x128xf32>
      %39 = tpu.reciprocal %38 {approx = true} : vector<32x128xf32> -> vector<32x128xf32>
      %40 = arith.mulf %36, %39 : vector<32x128xf32>
      %cst_13 = arith.constant 1.000000e+00 : f32
      %41 = vector.broadcast %cst_13 : f32 to vector<32x128xf32>
      %42 = arith.subf %41, %40 : vector<32x128xf32>
      %cst_14 = arith.constant 0.000000e+00 : f32
      %43 = vector.broadcast %cst_14 : f32 to vector<32x128xf32>
      %44 = arith.maximumf %42, %43 : vector<32x128xf32>
      %45 = arith.mulf %44, %44 : vector<32x128xf32>
      %46 = arith.mulf %45, %32 : vector<32x128xf32>
      %cst_15 = arith.constant 7.500000e-01 : f32
      %cst_16 = arith.constant 2.500000e-01 : f32
      %47 = vector.broadcast %cst_15 : f32 to vector<32x128xf32>
      %48 = vector.broadcast %cst_16 : f32 to vector<32x128xf32>
      %49 = arith.select %19, %47, %48 : vector<32x128xi1>, vector<32x128xf32>
      %50 = arith.mulf %49, %46 : vector<32x128xf32>
      %51 = arith.addi %5, %13 : i32
      %52 = tpu.iota {dimensions = array<i32: 0>} : vector<32x128xi32>
      %53 = vector.broadcast %51 : i32 to vector<32x128xi32>
      %54 = arith.addi %53, %52 : vector<32x128xi32>
      %c16_i32_17 = arith.constant 16 : i32
      %55 = vector.broadcast %c16_i32_17 : i32 to vector<32x128xi32>
      %56 = arith.cmpi slt, %54, %55 : vector<32x128xi32>
      %cst_18 = arith.constant 0.000000e+00 : f32
      %57 = vector.broadcast %cst_18 : f32 to vector<32x128xf32>
      %58 = arith.select %56, %50, %57 : vector<32x128xi1>, vector<32x128xf32>
      %c0_19 = arith.constant 0 : index
      %c0_20 = arith.constant 0 : index
      %59 = vector.load %arg4[%c0_19, %c0_20] : memref<32x128xf32, #tpu.memory_space<vmem>>, vector<32x128xf32>
      %60 = vector.shape_cast %58 : vector<32x128xf32> to vector<1x32x128xf32>
      %cst_21 = arith.constant dense<0.000000e+00> : vector<32x128xf32>
      %61 = vector.multi_reduction <add>, %60, %cst_21 [0] : vector<1x32x128xf32> to vector<32x128xf32>
      %62 = arith.addf %59, %61 : vector<32x128xf32>
      %c0_22 = arith.constant 0 : index
      %c0_23 = arith.constant 0 : index
      %63 = vector.load %arg4[%c0_22, %c0_23] : memref<32x128xf32, #tpu.memory_space<vmem>>, vector<32x128xf32>
      tpu.vector_store %arg4[%c0_22, %c0_23], %62 {strides = array<i32>} : memref<32x128xf32, #tpu.memory_space<vmem>>, vector<32x128xf32>,
    } else {
    }
    return
  }
  func.func @transform_0(%arg0: i32, %arg1: i32) -> (i32, i32) {
    %c1_i32 = arith.constant 1 : i32
    %0 = arith.muli %arg0, %c1_i32 : i32
    %1 = arith.addi %0, %arg1 : i32
    %c0_i32 = arith.constant 0 : i32
    %2 = arith.minsi %1, %c0_i32 : i32
    %c0_i32_0 = arith.constant 0 : i32
    %c0_i32_1 = arith.constant 0 : i32
    return %2, %c0_i32_0 : i32, i32
  }
  func.func @transform_1(%arg0: i32, %arg1: i32) -> (i32, i32) {
    %c1_i32 = arith.constant 1 : i32
    %0 = arith.muli %arg0, %c1_i32 : i32
    %1 = arith.addi %0, %arg1 : i32
    %c0_i32 = arith.constant 0 : i32
    %2 = arith.minsi %1, %c0_i32 : i32
    %c0_i32_0 = arith.constant 0 : i32
    %c0_i32_1 = arith.constant 0 : i32
    return %2, %c0_i32_0 : i32, i32
  }
  func.func @transform_2(%arg0: i32, %arg1: i32) -> (i32, i32) {
    %c0_i32 = arith.constant 0 : i32
    %c0_i32_0 = arith.constant 0 : i32
    return %arg0, %c0_i32 : i32, i32
  }
}

</mosaic_0001>

<llo_original>
// kernel: tpu_custom_call.1
$region0: #{tpu_custom_call.1}
  #allocation0 [shape = 'u32[]', space=smem, size = 0x4, offset = 0x4, fixed_abs, tag = 'smem constant byte address 0x4 - core index']
  #allocation1 [shape = 'u32[144,128]{1,0:T(1,128)}', space=vmem, size = 0x12000, scoped, tag = 'internal scratch']
  %s0 = inlined_call_operand.hbm [shape: f32[16,128], index: 0, kind: input, shape index: {}]
  %s1 = inlined_call_operand.hbm [shape: f32[16,128], index: 1, kind: input, shape index: {}]
  %s2 = inlined_call_operand.hbm [shape: f32[32,128], index: 2, kind: output, shape index: {}]
  %s3 = sld [smem:[#allocation0]]
  $region38: #{tpu_custom_call.1} parent=0
    _
  %s5 = ssub.s32 1, %s3
  %s6 = scalar_select 0, %s5, %s3
  $region1: #{tpu_custom_call.1} parent=0
    #allocation2 [shape = 'u8[16384]{0}', space=vmem, size = 0x4000, scoped, tag = 'input window, operand 0, single buffered']
    #allocation3 [shape = 's32[1]{0}', space=sflag, size = 0x4, scoped, tag = 'scoped memory for tpu_custom_call.1']
    #allocation4 [shape = 's32[1]{0}', space=sflag, size = 0x4, scoped, tag = 'scoped memory for tpu_custom_call.1']
    #allocation5 [shape = 'u8[16384]{0}', space=vmem, size = 0x4000, scoped, tag = 'input window, operand 1, single buffered']
    #allocation6 [shape = 's32[1]{0}', space=sflag, size = 0x4, scoped, tag = 'scoped memory for tpu_custom_call.1']
    #allocation7 [shape = 'u8[16384]{0}', space=vmem, size = 0x4000, scoped, tag = 'output window, operand 0, single buffered']
    %7 = vsyncpa [#allocation3], 0
    %8 = vsyncpa [#allocation6], 0
    %9 = vsyncpa [#allocation4], 0
    // Predicated region
    $region2: #{tpu_custom_call.1} parent=1 // pred_check
      _
    $region3: #{tpu_custom_call.1} parent=1 // pred_check_branch
      %11 = sbr.rel (0) target = $region5
    $region4: #{tpu_custom_call.1} parent=1 // pred_region
      %s12 = sadd.s32 0, 0
      %p13 = scmp.lt.s32.totalorder %s12, 0
      %s14 = scalar_select %p13, %s12, 0
      %s15 = smul.u32 4, %s14
      %s16 = ssub.s32 2, %s15
      %s17 = smul.u32 128, %s16
      %s19 = ssub.s32 512, %s17
      %20 = vsyncadd [#allocation3], %s19
      %p21 = scmp.ne.s32.totalorder 0, %s17
      %s22 = smul.addr %s15, 128
      %s23 = scalar_lea.hbm %s0, %s22
      %s24 = smul.u32 8, %s16
      %s25 = sshll.u32 [#allocation2], 4
      %s26 = int_to_ptr.vmem [resolvable:$true] %s25
      %s27 = sshll.u32 %s24, 4
      %31 = dma.hbm_to_vmem [thread:$0]  (%p21), %s23, %s27, %s26, [#allocation3], 128, 128, 8
    $region5: #{tpu_custom_call.1} parent=1 // pred_fallthru
      _
    // Predicated region
    $region6: #{tpu_custom_call.1} parent=1 // pred_check
      _
    $region7: #{tpu_custom_call.1} parent=1 // pred_check_branch
      %33 = sbr.rel (0) target = $region9
    $region8: #{tpu_custom_call.1} parent=1 // pred_region
      %s34 = sadd.s32 0, 0
      %p35 = scmp.lt.s32.totalorder %s34, 0
      %s36 = scalar_select %p35, %s34, 0
      %s37 = smul.u32 4, %s36
      %s38 = ssub.s32 2, %s37
      %s39 = smul.u32 128, %s38
      %s41 = ssub.s32 512, %s39
      %42 = vsyncadd [#allocation6], %s41
      %p43 = scmp.ne.s32.totalorder 0, %s39
      %s44 = smul.addr %s37, 128
      %s45 = scalar_lea.hbm %s1, %s44
      %s46 = smul.u32 8, %s38
      %s47 = sshll.u32 [#allocation5], 4
      %s48 = int_to_ptr.vmem [resolvable:$true] %s47
      %s49 = sshll.u32 %s46, 4
      %53 = dma.hbm_to_vmem [thread:$0]  (%p43), %s45, %s49, %s48, [#allocation6], 128, 128, 8
    $region9: #{tpu_custom_call.1} parent=1 // pred_fallthru
      _
    // Predicated region
    $region10: #{tpu_custom_call.1} parent=1 // pred_check
      _
    $region11: #{tpu_custom_call.1} parent=1 // pred_check_branch
      %55 = sbr.rel (0) target = $region13
    $region12: #{tpu_custom_call.1} parent=1 // pred_region
      %56 = dma.done [#allocation3], 512
    $region13: #{tpu_custom_call.1} parent=1 // pred_fallthru
      _
    // Predicated region
    $region14: #{tpu_custom_call.1} parent=1 // pred_check
      _
    $region15: #{tpu_custom_call.1} parent=1 // pred_check_branch
      %58 = sbr.rel (0) target = $region17
    $region16: #{tpu_custom_call.1} parent=1 // pred_region
      %59 = dma.done [#allocation6], 512
    $region17: #{tpu_custom_call.1} parent=1 // pred_fallthru
      _
    %s60 = sadd.s32 0, 0
    %p61 = scmp.lt.s32.totalorder %s60, 0
    %s62 = scalar_select %p61, %s60, 0
    %s63 = smul.u32 4, %s62
    %s64 = ssub.s32 2, %s63
    %s65 = smul.u32 128, %s64
    %s66 = sadd.s32 0, 0
    %p67 = scmp.lt.s32.totalorder %s66, 0
    %s68 = scalar_select %p67, %s66, 0
    %s69 = smul.u32 4, %s68
    %s70 = ssub.s32 2, %s69
    %s71 = smul.u32 128, %s70
    %p72 = scmp.eq.s32.totalorder 0, 0
    // Predicated region
    $region18: #{tpu_custom_call.1} parent=1 // pred_check
      %p73 = pneg %p72
    $region19: #{tpu_custom_call.1} parent=1 // pred_check_branch
      %75 = sbr.rel (%p73) target = $region21
    $region20: #{tpu_custom_call.1} parent=1 // pred_region
      %76 = vst [vmem:[#allocation7] sm:$0xff] 0.0
      %77 = vst [vmem:[#allocation7 + $0x8] sm:$0xff] 0.0
      %78 = vst [vmem:[#allocation7 + $0x10] sm:$0xff] 0.0
      %79 = vst [vmem:[#allocation7 + $0x18] sm:$0xff] 0.0
    $region21: #{tpu_custom_call.1} parent=1 // pred_fallthru
      _
    %s80 = sadd.s32 0, 0
    %s81 = smul.u32 %s80, 32
    %s82 = sadd.s32 %s81, 32
    %p83 = scmp.le.s32.totalorder %s82, 16
    // Predicated region
    $region22: #{tpu_custom_call.1} parent=1 // pred_check
      %p84 = pneg %p83
    $region23: #{tpu_custom_call.1} parent=1 // pred_check_branch
      %86 = sbr.rel (%p84) target = $region25
    $region24: #{tpu_custom_call.1} parent=1 // pred_region
      %v87 = vld [vmem:[#allocation2] sm:$0xff]
      %v88 = vld [vmem:[#allocation2 + $0x8] sm:$0xff]
      %v89 = vld [vmem:[#allocation2 + $0x10] sm:$0xff]
      %v90 = vld [vmem:[#allocation2 + $0x18] sm:$0xff]
      %v91 = vld [vmem:[#allocation5] sm:$0xff]
      %v92 = vld [vmem:[#allocation5 + $0x8] sm:$0xff]
      %v93 = vld [vmem:[#allocation5 + $0x10] sm:$0xff]
      %v94 = vld [vmem:[#allocation5 + $0x18] sm:$0xff]
      %vm95 = vcmp.gt.f32.partialorder %v91, 0.0
      %vm96 = vcmp.gt.f32.partialorder %v92, 0.0
      %vm97 = vcmp.gt.f32.partialorder %v93, 0.0
      %vm98 = vcmp.gt.f32.partialorder %v94, 0.0
      %v99 = vsub.f32 0.0, %v87
      %v100 = vsub.f32 0.0, %v88
      %v101 = vsub.f32 0.0, %v89
      %v102 = vsub.f32 0.0, %v90
      %v103 = vsel %vm95, %v87, %v99
      %v104 = vsel %vm96, %v88, %v100
      %v105 = vsel %vm97, %v89, %v101
      %v106 = vsel %vm98, %v90, %v102
      %v107 = vand.u32 2147483647, %v87
      %v108 = vand.u32 2147483647, %v88
      %v109 = vand.u32 2147483647, %v89
      %v110 = vand.u32 2147483647, %v90
      %v111 = vsub.f32 0.0, %v107
      %v112 = vsub.f32 0.0, %v108
      %v113 = vsub.f32 0.0, %v109
      %v114 = vsub.f32 0.0, %v110
      %v115 = vmul.f32 %v111, 1.442695
      %v116 = vpow.pop %v115
      %v117 = vmul.f32 %v112, 1.442695
      %v118 = vpow.pop %v117
      %v119 = vmul.f32 %v113, 1.442695
      %v120 = vpow.pop %v119
      %v121 = vmul.f32 %v114, 1.442695
      %v122 = vpow.pop %v121
      %v123 = vsub.f32 0.0, %v103
      %v124 = vsub.f32 0.0, %v104
      %v125 = vsub.f32 0.0, %v105
      %v126 = vsub.f32 0.0, %v106
      %v127 = vmax.f32 %v123, 0.0
      %v128 = vmax.f32 %v124, 0.0
      %v129 = vmax.f32 %v125, 0.0
      %v130 = vmax.f32 %v126, 0.0
      %v131 = vadd.f32 %v116, 1.0
      %v132 = vlog2.pop %v131
      %v133 = vmul.f32 %v132, 0.6931472
      %v134 = vmul.f32 -0.5, %v116
      %v135 = vadd.f32 %v134, 1.0
      %v136 = vmul.f32 %v135, %v116
      %v137 = vand.u32 2147483647, %v116
      %vm138 = vcmp.lt.f32.partialorder %v137, 0.0004427343
      %v139 = vsel %vm138, %v136, %v133
      %v140 = vadd.f32 %v118, 1.0
      %v141 = vlog2.pop %v140
      %v142 = vmul.f32 %v141, 0.6931472
      %v143 = vmul.f32 -0.5, %v118
      %v144 = vadd.f32 %v143, 1.0
      %v145 = vmul.f32 %v144, %v118
      %v146 = vand.u32 2147483647, %v118
      %vm147 = vcmp.lt.f32.partialorder %v146, 0.0004427343
      %v148 = vsel %vm147, %v145, %v142
      %v149 = vadd.f32 %v120, 1.0
      %v150 = vlog2.pop %v149
      %v151 = vmul.f32 %v150, 0.6931472
      %v152 = vmul.f32 -0.5, %v120
      %v153 = vadd.f32 %v152, 1.0
      %v154 = vmul.f32 %v153, %v120
      %v155 = vand.u32 2147483647, %v120
      %vm156 = vcmp.lt.f32.partialorder %v155, 0.0004427343
      %v157 = vsel %vm156, %v154, %v151
      %v158 = vadd.f32 %v122, 1.0
      %v159 = vlog2.pop %v158
      %v160 = vmul.f32 %v159, 0.6931472
      %v161 = vmul.f32 -0.5, %v122
      %v162 = vadd.f32 %v161, 1.0
      %v163 = vmul.f32 %v162, %v122
      %v164 = vand.u32 2147483647, %v122
      %vm165 = vcmp.lt.f32.partialorder %v164, 0.0004427343
      %v166 = vsel %vm165, %v163, %v160
      %v167 = vadd.f32 %v127, %v139
      %v168 = vadd.f32 %v128, %v148
      %v169 = vadd.f32 %v129, %v157
      %v170 = vadd.f32 %v130, %v166
      %vm171 = vcmp.ge.f32.partialorder %v103, 0.0
      %vm172 = vcmp.ge.f32.partialorder %v104, 0.0
      %vm173 = vcmp.ge.f32.partialorder %v105, 0.0
      %vm174 = vcmp.ge.f32.partialorder %v106, 0.0
      %v175 = vsel %vm171, 1.0, %v116
      %v176 = vsel %vm172, 1.0, %v118
      %v177 = vsel %vm173, 1.0, %v120
      %v178 = vsel %vm174, 1.0, %v122
      %v179 = vadd.f32 %v116, 1.0
      %v180 = vadd.f32 %v118, 1.0
      %v181 = vadd.f32 %v120, 1.0
      %v182 = vadd.f32 %v122, 1.0
      %v183 = vrcp.pop %v179
      %v184 = vrcp.pop %v180
      %v185 = vrcp.pop %v181
      %v186 = vrcp.pop %v182
      %v187 = vmul.f32 %v175, %v183
      %v188 = vmul.f32 %v176, %v184
      %v189 = vmul.f32 %v177, %v185
      %v190 = vmul.f32 %v178, %v186
      %v191 = vsub.f32 1.0, %v187
      %v192 = vsub.f32 1.0, %v188
      %v193 = vsub.f32 1.0, %v189
      %v194 = vsub.f32 1.0, %v190
      %v195 = vmax.f32 %v191, 0.0
      %v196 = vmax.f32 %v192, 0.0
      %v197 = vmax.f32 %v193, 0.0
      %v198 = vmax.f32 %v194, 0.0
      %v199 = vmul.f32 %v195, %v195
      %v200 = vmul.f32 %v196, %v196
      %v201 = vmul.f32 %v197, %v197
      %v202 = vmul.f32 %v198, %v198
      %v203 = vmul.f32 %v199, %v167
      %v204 = vmul.f32 %v200, %v168
      %v205 = vmul.f32 %v201, %v169
      %v206 = vmul.f32 %v202, %v170
      %v207 = vsel %vm95, 0.75, 0.25
      %v208 = vsel %vm96, 0.75, 0.25
      %v209 = vsel %vm97, 0.75, 0.25
      %v210 = vsel %vm98, 0.75, 0.25
      %v211 = vmul.f32 %v207, %v203
      %v212 = vmul.f32 %v208, %v204
      %v213 = vmul.f32 %v209, %v205
      %v214 = vmul.f32 %v210, %v206
      %v215 = vld [vmem:[#allocation7] sm:$0xff]
      %v216 = vld [vmem:[#allocation7 + $0x8] sm:$0xff]
      %v217 = vld [vmem:[#allocation7 + $0x10] sm:$0xff]
      %v218 = vld [vmem:[#allocation7 + $0x18] sm:$0xff]
      %v219 = vadd.f32 %v211, 0.0
      %v220 = vadd.f32 %v212, 0.0
      %v221 = vadd.f32 %v213, 0.0
      %v222 = vadd.f32 %v214, 0.0
      %v223 = vadd.f32 %v215, %v219
      %v224 = vadd.f32 %v216, %v220
      %v225 = vadd.f32 %v217, %v221
      %v226 = vadd.f32 %v218, %v222
      %227 = vst [vmem:[#allocation7] sm:$0xff] %v223
      %228 = vst [vmem:[#allocation7 + $0x8] sm:$0xff] %v224
      %229 = vst [vmem:[#allocation7 + $0x10] sm:$0xff] %v225
      %230 = vst [vmem:[#allocation7 + $0x18] sm:$0xff] %v226
    $region25: #{tpu_custom_call.1} parent=1 // pred_fallthru
      _
    %p231 = scmp.gt.s32.totalorder %s82, 16
    // Predicated region
    $region26: #{tpu_custom_call.1} parent=1 // pred_check
      %p232 = pneg %p231
    $region27: #{tpu_custom_call.1} parent=1 // pred_check_branch
      %234 = sbr.rel (%p232) target = $region29
    $region28: #{tpu_custom_call.1} parent=1 // pred_region
      %v235 = vld [vmem:[#allocation2] sm:$0xff]
      %v236 = vld [vmem:[#allocation2 + $0x8] sm:$0xff]
      %v237 = vld [vmem:[#allocation2 + $0x10] sm:$0xff]
      %v238 = vld [vmem:[#allocation2 + $0x18] sm:$0xff]
      %v239 = vld [vmem:[#allocation5] sm:$0xff]
      %v240 = vld [vmem:[#allocation5 + $0x8] sm:$0xff]
      %v241 = vld [vmem:[#allocation5 + $0x10] sm:$0xff]
      %v242 = vld [vmem:[#allocation5 + $0x18] sm:$0xff]
      %vm243 = vcmp.gt.f32.partialorder %v239, 0.0
      %vm244 = vcmp.gt.f32.partialorder %v240, 0.0
      %vm245 = vcmp.gt.f32.partialorder %v241, 0.0
      %vm246 = vcmp.gt.f32.partialorder %v242, 0.0
      %v247 = vsub.f32 0.0, %v235
      %v248 = vsub.f32 0.0, %v236
      %v249 = vsub.f32 0.0, %v237
      %v250 = vsub.f32 0.0, %v238
      %v251 = vsel %vm243, %v235, %v247
      %v252 = vsel %vm244, %v236, %v248
      %v253 = vsel %vm245, %v237, %v249
      %v254 = vsel %vm246, %v238, %v250
      %v255 = vand.u32 2147483647, %v235
      %v256 = vand.u32 2147483647, %v236
      %v257 = vand.u32 2147483647, %v237
      %v258 = vand.u32 2147483647, %v238
      %v259 = vsub.f32 0.0, %v255
      %v260 = vsub.f32 0.0, %v256
      %v261 = vsub.f32 0.0, %v257
      %v262 = vsub.f32 0.0, %v258
      %v263 = vmul.f32 %v259, 1.442695
      %v264 = vpow.pop %v263
      %v265 = vmul.f32 %v260, 1.442695
      %v266 = vpow.pop %v265
      %v267 = vmul.f32 %v261, 1.442695
      %v268 = vpow.pop %v267
      %v269 = vmul.f32 %v262, 1.442695
      %v270 = vpow.pop %v269
      %v271 = vsub.f32 0.0, %v251
      %v272 = vsub.f32 0.0, %v252
      %v273 = vsub.f32 0.0, %v253
      %v274 = vsub.f32 0.0, %v254
      %v275 = vmax.f32 %v271, 0.0
      %v276 = vmax.f32 %v272, 0.0
      %v277 = vmax.f32 %v273, 0.0
      %v278 = vmax.f32 %v274, 0.0
      %v279 = vadd.f32 %v264, 1.0
      %v280 = vlog2.pop %v279
      %v281 = vmul.f32 %v280, 0.6931472
      %v282 = vmul.f32 -0.5, %v264
      %v283 = vadd.f32 %v282, 1.0
      %v284 = vmul.f32 %v283, %v264
      %v285 = vand.u32 2147483647, %v264
      %vm286 = vcmp.lt.f32.partialorder %v285, 0.0004427343
      %v287 = vsel %vm286, %v284, %v281
      %v288 = vadd.f32 %v266, 1.0
      %v289 = vlog2.pop %v288
      %v290 = vmul.f32 %v289, 0.6931472
      %v291 = vmul.f32 -0.5, %v266
      %v292 = vadd.f32 %v291, 1.0
      %v293 = vmul.f32 %v292, %v266
      %v294 = vand.u32 2147483647, %v266
      %vm295 = vcmp.lt.f32.partialorder %v294, 0.0004427343
      %v296 = vsel %vm295, %v293, %v290
      %v297 = vadd.f32 %v268, 1.0
      %v298 = vlog2.pop %v297
      %v299 = vmul.f32 %v298, 0.6931472
      %v300 = vmul.f32 -0.5, %v268
      %v301 = vadd.f32 %v300, 1.0
      %v302 = vmul.f32 %v301, %v268
      %v303 = vand.u32 2147483647, %v268
      %vm304 = vcmp.lt.f32.partialorder %v303, 0.0004427343
      %v305 = vsel %vm304, %v302, %v299
      %v306 = vadd.f32 %v270, 1.0
      %v307 = vlog2.pop %v306
      %v308 = vmul.f32 %v307, 0.6931472
      %v309 = vmul.f32 -0.5, %v270
      %v310 = vadd.f32 %v309, 1.0
      %v311 = vmul.f32 %v310, %v270
      %v312 = vand.u32 2147483647, %v270
      %vm313 = vcmp.lt.f32.partialorder %v312, 0.0004427343
      %v314 = vsel %vm313, %v311, %v308
      %v315 = vadd.f32 %v275, %v287
      %v316 = vadd.f32 %v276, %v296
      %v317 = vadd.f32 %v277, %v305
      %v318 = vadd.f32 %v278, %v314
      %vm319 = vcmp.ge.f32.partialorder %v251, 0.0
      %vm320 = vcmp.ge.f32.partialorder %v252, 0.0
      %vm321 = vcmp.ge.f32.partialorder %v253, 0.0
      %vm322 = vcmp.ge.f32.partialorder %v254, 0.0
      %v323 = vsel %vm319, 1.0, %v264
      %v324 = vsel %vm320, 1.0, %v266
      %v325 = vsel %vm321, 1.0, %v268
      %v326 = vsel %vm322, 1.0, %v270
      %v327 = vadd.f32 %v264, 1.0
      %v328 = vadd.f32 %v266, 1.0
      %v329 = vadd.f32 %v268, 1.0
      %v330 = vadd.f32 %v270, 1.0
      %v331 = vrcp.pop %v327
      %v332 = vrcp.pop %v328
      %v333 = vrcp.pop %v329
      %v334 = vrcp.pop %v330
      %v335 = vmul.f32 %v323, %v331
      %v336 = vmul.f32 %v324, %v332
      %v337 = vmul.f32 %v325, %v333
      %v338 = vmul.f32 %v326, %v334
      %v339 = vsub.f32 1.0, %v335
      %v340 = vsub.f32 1.0, %v336
      %v341 = vsub.f32 1.0, %v337
      %v342 = vsub.f32 1.0, %v338
      %v343 = vmax.f32 %v339, 0.0
      %v344 = vmax.f32 %v340, 0.0
      %v345 = vmax.f32 %v341, 0.0
      %v346 = vmax.f32 %v342, 0.0
      %v347 = vmul.f32 %v343, %v343
      %v348 = vmul.f32 %v344, %v344
      %v349 = vmul.f32 %v345, %v345
      %v350 = vmul.f32 %v346, %v346
      %v351 = vmul.f32 %v347, %v315
      %v352 = vmul.f32 %v348, %v316
      %v353 = vmul.f32 %v349, %v317
      %v354 = vmul.f32 %v350, %v318
      %v355 = vsel %vm243, 0.75, 0.25
      %v356 = vsel %vm244, 0.75, 0.25
      %v357 = vsel %vm245, 0.75, 0.25
      %v358 = vsel %vm246, 0.75, 0.25
      %v359 = vmul.f32 %v355, %v351
      %v360 = vmul.f32 %v356, %v352
      %v361 = vmul.f32 %v357, %v353
      %v362 = vmul.f32 %v358, %v354
      %s363 = sadd.s32 %s81, 0
      %v364 = vlaneseq
      %v365 = vshrl.u32 %v364, 7
      %v366 = vadd.s32 %v365, 8
      %v367 = vadd.s32 %v365, 16
      %v368 = vadd.s32 %v365, 24
      %v369 = vstv %s363
      %v370 = vadd.s32 %v369, %v365
      %v371 = vadd.s32 %v369, %v366
      %v372 = vadd.s32 %v369, %v367
      %v373 = vadd.s32 %v369, %v368
      %vm374 = vcmp.lt.s32.totalorder %v370, 16
      %vm375 = vcmp.lt.s32.totalorder %v371, 16
      %vm376 = vcmp.lt.s32.totalorder %v372, 16
      %vm377 = vcmp.lt.s32.totalorder %v373, 16
      %v378 = vsel %vm374, %v359, 0.0
      %v379 = vsel %vm375, %v360, 0.0
      %v380 = vsel %vm376, %v361, 0.0
      %v381 = vsel %vm377, %v362, 0.0
      %v382 = vld [vmem:[#allocation7] sm:$0xff]
      %v383 = vld [vmem:[#allocation7 + $0x8] sm:$0xff]
      %v384 = vld [vmem:[#allocation7 + $0x10] sm:$0xff]
      %v385 = vld [vmem:[#allocation7 + $0x18] sm:$0xff]
      %v386 = vadd.f32 %v378, 0.0
      %v387 = vadd.f32 %v379, 0.0
      %v388 = vadd.f32 %v380, 0.0
      %v389 = vadd.f32 %v381, 0.0
      %v390 = vadd.f32 %v382, %v386
      %v391 = vadd.f32 %v383, %v387
      %v392 = vadd.f32 %v384, %v388
      %v393 = vadd.f32 %v385, %v389
      %394 = vst [vmem:[#allocation7] sm:$0xff] %v390
      %395 = vst [vmem:[#allocation7 + $0x8] sm:$0xff] %v391
      %396 = vst [vmem:[#allocation7 + $0x10] sm:$0xff] %v392
      %397 = vst [vmem:[#allocation7 + $0x18] sm:$0xff] %v393
    $region29: #{tpu_custom_call.1} parent=1 // pred_fallthru
      _
    // Predicated region
    $region30: #{tpu_custom_call.1} parent=1 // pred_check
      _
    $region31: #{tpu_custom_call.1} parent=1 // pred_check_branch
      %399 = sbr.rel (0) target = $region33
    $region32: #{tpu_custom_call.1} parent=1 // pred_region
      %s401 = ssub.s32 512, 512
      %402 = vsyncadd [#allocation4], %s401
      %s403 = sshll.u32 [#allocation7], 4
      %s404 = int_to_ptr.vmem [resolvable:$true] %s403
      %409 = dma.vmem_to_hbm [thread:$0]  %s404, 512, %s2, [#allocation4], 128, 128, 8
    $region33: #{tpu_custom_call.1} parent=1 // pred_fallthru
      _
    // Predicated region
    $region34: #{tpu_custom_call.1} parent=1 // pred_check
      _
    $region35: #{tpu_custom_call.1} parent=1 // pred_check_branch
      %411 = sbr.rel (0) target = $region37
    $region36: #{tpu_custom_call.1} parent=1 // pred_region
      %412 = dma.done [#allocation4], 512
    $region37: #{tpu_custom_call.1} parent=1 // pred_fallthru
      _
    %413 = vsyncpa [#allocation3], 1
    %414 = vsyncpa [#allocation6], 1
    %415 = vsyncpa [#allocation4], 1

</llo_original>
